<compile_context>
chip_gen: v7x
topology: tpu7x:2x2x1
jax: 0.10.0
libtpu: 0.0.40
codegen_flags: <defaults>
</compile_context>

<pallas_src>
import functools

import jax
import jax.numpy as jnp
from jax.experimental import pallas as pl
from jax.experimental.pallas import tpu as pltpu


def _round_up(x, m):
    return ((x + m - 1) // m) * m


def _pick_batch_tile(batch, max_tile=512):
    """8-aligned batch tile; >=2 blocks for moderate batches (v7x megacore)."""
    bp = _round_up(batch, 8)
    bt = min(max_tile, bp)
    if bp > 64 and bp // bt < 2:
        bt = _round_up((bp + 1) // 2, 8)
    return bt


# ----------------------------------------------------------------------------
# Shared cell math: one RNNAgent forward step on a (bt, *) block.
# Weights are [in, out] values (bf16 by default); biases are f32 row vectors.
# ----------------------------------------------------------------------------
def _cell(x, h, W1, W2, WG, WH1, WH2, b1, b2, bg, bh1, bh2, H):
    f32 = jnp.float32
    cd = W1.dtype  # MXU input dtype; accumulation is f32.

    def mm(a, w):
        return jnp.dot(a.astype(cd), w, preferred_element_type=f32)

    # FeatureLayer: fc1 -> ReLU -> fc2 -> ReLU
    x1 = jnp.maximum(mm(x, W1) + b1, 0.0)
    x2 = jnp.maximum(mm(x1, W2) + b2, 0.0)

    # Fused GRU gates: one lane-dense dot, columns = [r | z | gi_n | gh_n].
    xh = jnp.concatenate([x2, h], axis=-1)          # (bt, 2H) f32
    g = mm(xh, WG) + bg                             # (bt, 4H) f32
    r = jax.nn.sigmoid(g[:, 0:H])
    z = jax.nn.sigmoid(g[:, H:2 * H])
    n = jnp.tanh(g[:, 2 * H:3 * H] + r * g[:, 3 * H:4 * H])
    h_new = (1.0 - z) * n + z * h

    # Head (n_head_layer == 2): Linear -> ReLU -> Linear (output lanes padded
    # inside the weight only; the HBM store is unpadded n_actions wide).
    y = jnp.maximum(mm(h_new, WH1) + bh1, 0.0)
    qf = mm(y, WH2) + bh2
    return qf, h_new


def _unpack_biases(bias, H, QP):
    b1 = bias[0:1, 0:H]
    b2 = bias[1:2, 0:H]
    bg = bias[2:3, 0:4 * H]
    bh1 = bias[3:4, 0:H]
    bh2 = bias[4:5, 0:QP]
    return b1, b2, bg, bh1, bh2


# ----------------------------------------------------------------------------
# Kernels
# ----------------------------------------------------------------------------
def _rnn_step_kernel(H, NA, x_ref, h_ref, w1_ref, w2_ref, wg_ref, wh1_ref,
                     wh2_ref, b_ref, q_ref, hout_ref):
    W1, W2, WG = w1_ref[...], w2_ref[...], wg_ref[...]
    WH1, WH2 = wh1_ref[...], wh2_ref[...]
    QP = WH2.shape[1]
    b1, b2, bg, bh1, bh2 = _unpack_biases(b_ref[...], H, QP)

    qf, h_new = _cell(x_ref[...].astype(jnp.float32),
                      h_ref[...].astype(jnp.float32),
                      W1, W2, WG, WH1, WH2, b1, b2, bg, bh1, bh2, H)
    q_ref[...] = qf[:, :NA].astype(q_ref.dtype)
    hout_ref[...] = h_new.astype(hout_ref.dtype)


def _rnn_rollout_kernel(H, NA, Tc, T_valid, has_tail,
                        xs_ref, h0_ref, w1_ref, w2_ref, wg_ref, wh1_ref,
                        wh2_ref, b_ref, qs_ref, hlast_ref, h_carry):
    c = pl.program_id(1)  # time-chunk index (inner, "arbitrary" axis)

    @pl.when(c == 0)
    def _():
        h_carry[...] = h0_ref[...].astype(jnp.float32)

    # Hoist weight/bias loads above the unrolled time loop.
    W1, W2, WG = w1_ref[...], w2_ref[...], wg_ref[...]
    WH1, WH2 = wh1_ref[...], wh2_ref[...]
    QP = WH2.shape[1]
    b1, b2, bg, bh1, bh2 = _unpack_biases(b_ref[...], H, QP)

    h = h_carry[...]
    for i in range(Tc):  # static trip count -> fully unrolled
        x = xs_ref[i].astype(jnp.float32)
        qf, h_new = _cell(x, h, W1, W2, WG, WH1, WH2,
                          b1, b2, bg, bh1, bh2, H)
        if has_tail:
            # Do not let zero-padded timesteps advance the hidden state.
            t_glob = c * Tc + i
            h = jnp.where(t_glob < T_valid, h_new, h)
        else:
            h = h_new
        qs_ref[i] = qf[:, :NA].astype(qs_ref.dtype)

    h_carry[...] = h

    @pl.when(c == pl.num_programs(1) - 1)
    def _():
        hlast_ref[...] = h.astype(hlast_ref.dtype)


# ----------------------------------------------------------------------------
# Parameter pre-packing (run once, outside the per-step forward).
# ----------------------------------------------------------------------------
_WEIGHT_ORDER = ("w1", "w2", "wg", "wh1", "wh2", "bias")


def prepack_params(params, hidden_dim, n_actions, *, weight_dtype=jnp.bfloat16):
    """PyTorch-layout params -> kernel layout.

    Weights -> [in, out] in `weight_dtype`; GRU gates fused into one
    [2H, 4H] matrix with columns [r | z | gi_n | gh_n]; head2 weight padded
    to >=128 output lanes; all biases packed into one f32 (8, W) slab with
    rows [b1, b2, b_gate(4H), bh1, bh2(padded), 0, 0, 0].
    NOTE: bf16 weights deviate slightly from exact f32 PyTorch parity.
    """
    H = hidden_dim
    f32 = jnp.float32

    def tw(w):
        return jnp.asarray(w, f32).T.astype(weight_dtype)

    wih = jnp.asarray(params["gru_wih"], f32)   # (3H, H), gate order r|z|n
    whh = jnp.asarray(params["gru_whh"], f32)
    bih = jnp.asarray(params["gru_bih"], f32)
    bhh = jnp.asarray(params["gru_bhh"], f32)

    def gate_t(mat, g):                          # [in, out] slice for gate g
        return mat[g * H:(g + 1) * H, :].T

    # Fused gate weight: rows 0:H take x2, rows H:2H take h.
    wg = jnp.zeros((2 * H, 4 * H), f32)
    wg = wg.at[0:H, 0:H].set(gate_t(wih, 0))
    wg = wg.at[0:H, H:2 * H].set(gate_t(wih, 1))
    wg = wg.at[0:H, 2 * H:3 * H].set(gate_t(wih, 2))
    wg = wg.at[H:2 * H, 0:H].set(gate_t(whh, 0))
    wg = wg.at[H:2 * H, H:2 * H].set(gate_t(whh, 1))
    wg = wg.at[H:2 * H, 3 * H:4 * H].set(gate_t(whh, 2))

    # Head-2 weight padded to a lane-dense (>=128) column count for the MXU;
    # only the first n_actions columns are ever stored to HBM.
    QP = max(128, _round_up(n_actions, 128))
    w2h = jnp.asarray(params["head2_w"], f32).T                    # (H, NA)
    wh2 = jnp.zeros((H, QP), f32).at[:, :n_actions].set(w2h)

    # Bias slab (f32): 8 sublane rows x SLABW lanes.
    slab_w = max(128, _round_up(4 * H, 128), QP)
    b_gate = jnp.concatenate([bih[0:H] + bhh[0:H],
                              bih[H:2 * H] + bhh[H:2 * H],
                              bih[2 * H:3 * H],
                              bhh[2 * H:3 * H]])
    bias = jnp.zeros((8, slab_w), f32)
    bias = bias.at[0, :H].set(jnp.asarray(params["fc1_b"], f32))
    bias = bias.at[1, :H].set(jnp.asarray(params["fc2_b"], f32))
    bias = bias.at[2, :4 * H].set(b_gate)
    bias = bias.at[3, :H].set(jnp.asarray(params["head1_b"], f32))
    bias = bias.at[4, :n_actions].set(jnp.asarray(params["head2_b"], f32))

    return {
        "w1": tw(params["fc1_w"]),
        "w2": tw(params["fc2_w"]),
        "wg": wg.astype(weight_dtype),
        "wh1": tw(params["head1_w"]),
        "wh2": wh2.astype(weight_dtype),
        "bias": bias,
    }


def _weight_args(packed):
    return tuple(packed[k] for k in _WEIGHT_ORDER)


# ----------------------------------------------------------------------------
# Wrappers
# ----------------------------------------------------------------------------
def rnn_agent_forward(inputs, hidden_state, packed, *, hidden_dim, n_actions,
                      batch_tile=None):
    """Single-step forward matching RNNAgent.forward: returns (q, h)."""
    f32 = jnp.float32
    H, NA = hidden_dim, n_actions
    x = jnp.asarray(inputs, f32)
    h_in = jnp.asarray(hidden_state, f32).reshape(-1, H)
    B, D = x.shape

    bt = batch_tile if batch_tile is not None else _pick_batch_tile(B)
    B_pad = _round_up(B, bt)
    if B_pad != B:
        x = jnp.pad(x, ((0, B_pad - B), (0, 0)))
        h_in = jnp.pad(h_in, ((0, B_pad - B), (0, 0)))

    wlist = _weight_args(packed)
    w_specs = [pl.BlockSpec(w.shape, lambda b: (0, 0)) for w in wlist]

    kernel = functools.partial(_rnn_step_kernel, H, NA)
    q, h = pl.pallas_call(
        kernel,
        out_shape=(
            jax.ShapeDtypeStruct((B_pad, NA), f32),
            jax.ShapeDtypeStruct((B_pad, H), f32),
        ),
        grid=(B_pad // bt,),
        in_specs=[pl.BlockSpec((bt, D), lambda b: (b, 0)),
                  pl.BlockSpec((bt, H), lambda b: (b, 0))] + w_specs,
        out_specs=(pl.BlockSpec((bt, NA), lambda b: (b, 0)),
                   pl.BlockSpec((bt, H), lambda b: (b, 0))),
        compiler_params=pltpu.CompilerParams(
            dimension_semantics=("parallel",)),
    )(x, h_in, *wlist)
    return q[:B], h[:B]


def rnn_agent_rollout(xs, hidden_state, packed, *, hidden_dim, n_actions,
                      batch_tile=None, time_chunk=None):
    """Multi-step rollout with the timestep loop inside one pallas_call.

    xs: (T, B, input_dim).  Returns (qs: (T, B, n_actions), h_last: (B, H)).
    Time is processed in chunks of `time_chunk` steps per grid iteration with
    the hidden state carried in a VMEM scratch; weights stay resident across
    the whole grid.
    """
    f32 = jnp.float32
    H, NA = hidden_dim, n_actions
    xs = jnp.asarray(xs, f32)
    T, B, D = xs.shape
    h0 = jnp.asarray(hidden_state, f32).reshape(-1, H)

    Tc = time_chunk if time_chunk is not None else min(8, T)
    Tc = max(1, min(Tc, T))
    T_pad = _round_up(T, Tc)
    has_tail = T_pad != T
    if has_tail:
        xs = jnp.pad(xs, ((0, T_pad - T), (0, 0), (0, 0)))

    bt = batch_tile if batch_tile is not None else _pick_batch_tile(B)
    B_pad = _round_up(B, bt)
    if B_pad != B:
        xs = jnp.pad(xs, ((0, 0), (0, B_pad - B), (0, 0)))
        h0 = jnp.pad(h0, ((0, B_pad - B), (0, 0)))

    wlist = _weight_args(packed)
    w_specs = [pl.BlockSpec(w.shape, lambda b, c: (0, 0)) for w in wlist]

    kernel = functools.partial(_rnn_rollout_kernel, H, NA, Tc, T, has_tail)
    qs, h_last = pl.pallas_call(
        kernel,
        out_shape=(
            jax.ShapeDtypeStruct((T_pad, B_pad, NA), f32),
            jax.ShapeDtypeStruct((B_pad, H), f32),
        ),
        grid=(B_pad // bt, T_pad // Tc),
        in_specs=[pl.BlockSpec((Tc, bt, D), lambda b, c: (c, b, 0)),
                  pl.BlockSpec((bt, H), lambda b, c: (b, 0))] + w_specs,
        out_specs=(pl.BlockSpec((Tc, bt, NA), lambda b, c: (c, b, 0)),
                   pl.BlockSpec((bt, H), lambda b, c: (b, 0))),
        scratch_shapes=[pltpu.VMEM((bt, H), jnp.float32)],
        compiler_params=pltpu.CompilerParams(
            dimension_semantics=("parallel", "arbitrary")),
    )(xs, h0, *wlist)
    return qs[:T, :B], h_last[:B]


# ----------------------------------------------------------------------------
# Synthetic params + references
# ----------------------------------------------------------------------------
def init_params(key, input_dim, hidden_dim, n_actions):
    """Deterministic synthetic parameters with PyTorch-style shapes."""
    H = hidden_dim
    ks = jax.random.split(key, 12)

    def u(k, shape, fan_in):
        bound = 1.0 / jnp.sqrt(jnp.float32(fan_in))
        return jax.random.uniform(k, shape, jnp.float32, -bound, bound)

    return {
        "fc1_w": u(ks[0], (H, input_dim), input_dim),
        "fc1_b": u(ks[1], (H,), input_dim),
        "fc2_w": u(ks[2], (H, H), H),
        "fc2_b": u(ks[3], (H,), H),
        "gru_wih": u(ks[4], (3 * H, H), H),
        "gru_bih": u(ks[5], (3 * H,), H),
        "gru_whh": u(ks[6], (3 * H, H), H),
        "gru_bhh": u(ks[7], (3 * H,), H),
        "head1_w": u(ks[8], (H, H), H),
        "head1_b": u(ks[9], (H,), H),
        "head2_w": u(ks[10], (n_actions, H), H),
        "head2_b": u(ks[11], (n_actions,), H),
    }


def _reference_forward_f32(inputs, hidden_state, params, hidden_dim):
    """Pure-f32 PyTorch-semantic reference."""
    H = hidden_dim
    x = jnp.maximum(inputs @ params["fc1_w"].T + params["fc1_b"], 0.0)
    x = jnp.maximum(x @ params["fc2_w"].T + params["fc2_b"], 0.0)
    h_in = hidden_state.reshape(-1, H)
    gi = x @ params["gru_wih"].T + params["gru_bih"]
    gh = h_in @ params["gru_whh"].T + params["gru_bhh"]
    r = jax.nn.sigmoid(gi[:, :H] + gh[:, :H])
    z = jax.nn.sigmoid(gi[:, H:2 * H] + gh[:, H:2 * H])
    n = jnp.tanh(gi[:, 2 * H:] + r * gh[:, 2 * H:])
    h = (1.0 - z) * n + z * h_in
    y = jnp.maximum(h @ params["head1_w"].T + params["head1_b"], 0.0)
    q = y @ params["head2_w"].T + params["head2_b"]
    return q, h


def _reference_forward_packed(inputs, hidden_state, packed, hidden_dim, n_actions):
    """Reference mirroring the kernel's exact packed/fused math."""
    f32 = jnp.float32
    H = hidden_dim
    cd = packed["w1"].dtype
    QP = packed["wh2"].shape[1]
    bias = packed["bias"]
    b1, b2 = bias[0:1, :H], bias[1:2, :H]
    bg = bias[2:3, :4 * H]
    bh1, bh2 = bias[3:4, :H], bias[4:5, :QP]

    def mm(a, w):
        return jnp.dot(a.astype(cd), w, preferred_element_type=f32)

    x = jnp.asarray(inputs, f32)
    h = jnp.asarray(hidden_state, f32).reshape(-1, H)
    x1 = jnp.maximum(mm(x, packed["w1"]) + b1, 0.0)
    x2 = jnp.maximum(mm(x1, packed["w2"]) + b2, 0.0)
    g = mm(jnp.concatenate([x2, h], axis=-1), packed["wg"]) + bg
    r = jax.nn.sigmoid(g[:, :H])
    z = jax.nn.sigmoid(g[:, H:2 * H])
    n = jnp.tanh(g[:, 2 * H:3 * H] + r * g[:, 3 * H:4 * H])
    h_new = (1.0 - z) * n + z * h
    y = jnp.maximum(mm(h_new, packed["wh1"]) + bh1, 0.0)
    q = mm(y, packed["wh2"]) + bh2
    return q[:, :n_actions], h_new


if __name__ == "__main__":
    # Shapes consistent with the module: args.rnn_hidden_dim=32, args.n_actions=8,
    # args.n_head_layer=2, input_shape=24, batch=2; short rollouts T=8 and T=6.
    input_dim, hidden_dim, n_actions, batch, T = 24, 32, 8, 2, 8

    key = jax.random.PRNGKey(0)
    kx, kh, kp, ks = jax.random.split(key, 4)

    inputs = jax.random.normal(kx, (batch, input_dim), jnp.float32)
    hidden_state = jax.random.normal(kh, (batch, hidden_dim), jnp.float32)
    params = init_params(kp, input_dim, hidden_dim, n_actions)

    # Pack once (bf16 weights feeding the MXU; f32 accumulation + elementwise).
    packed = prepack_params(params, hidden_dim, n_actions, weight_dtype=jnp.bfloat16)

    # --- single-step forward (matches RNNAgent.forward) ---------------------
    q, h = rnn_agent_forward(inputs, hidden_state, packed,
                             hidden_dim=hidden_dim, n_actions=n_actions)
    jax.block_until_ready((q, h))

    q_ref, h_ref = _reference_forward_packed(inputs, hidden_state, packed,
                                             hidden_dim, n_actions)
    q32, h32 = _reference_forward_f32(inputs, hidden_state, params, hidden_dim)

    assert q.shape == (batch, n_actions) and h.shape == (batch, hidden_dim)
    assert jnp.allclose(q, q_ref, atol=3e-3, rtol=3e-3)
    assert jnp.allclose(h, h_ref, atol=3e-3, rtol=3e-3)
    assert jnp.allclose(q, q32, atol=5e-2, rtol=5e-2)   # bf16-weight tolerance
    assert jnp.allclose(h, h32, atol=5e-2, rtol=5e-2)

    # --- multi-step rollout (time chunk = full T, loop inside the kernel) ---
    xs = jax.random.normal(ks, (T, batch, input_dim), jnp.float32)
    qs, h_last = rnn_agent_rollout(xs, hidden_state, packed,
                                   hidden_dim=hidden_dim, n_actions=n_actions)
    jax.block_until_ready((qs, h_last))

    h_r = hidden_state
    qs_list = []
    for t in range(T):
        q_t, h_r = _reference_forward_packed(xs[t], h_r, packed, hidden_dim, n_actions)
        qs_list.append(q_t)
    qs_ref = jnp.stack(qs_list, axis=0)

    assert qs.shape == (T, batch, n_actions) and h_last.shape == (batch, hidden_dim)
    assert jnp.allclose(qs, qs_ref, atol=5e-3, rtol=5e-3)
    assert jnp.allclose(h_last, h_r, atol=5e-3, rtol=5e-3)

    # --- rollout with T not divisible by the time chunk (masked tail path) --
    T2, Tc2 = 6, 4
    xs2 = xs[:T2]
    qs2, h_last2 = rnn_agent_rollout(xs2, hidden_state, packed,
                                     hidden_dim=hidden_dim, n_actions=n_actions,
                                     time_chunk=Tc2)
    jax.block_until_ready((qs2, h_last2))

    h_r2 = hidden_state
    qs2_list = []
    for t in range(T2):
        q_t, h_r2 = _reference_forward_packed(xs2[t], h_r2, packed,
                                              hidden_dim, n_actions)
        qs2_list.append(q_t)
    qs2_ref = jnp.stack(qs2_list, axis=0)

    assert qs2.shape == (T2, batch, n_actions)
    assert jnp.allclose(qs2, qs2_ref, atol=5e-3, rtol=5e-3)
    assert jnp.allclose(h_last2, h_r2, atol=5e-3, rtol=5e-3)

    print("KERNEL_OK")
</pallas_src>

<mosaic_0001>
module attributes {stable_mosaic.version = 11 : i64} {
  func.func @_rnn_step_kernel(%arg0: i32, %arg1: memref<8x24xf32, #tpu.memory_space<vmem>>, %arg2: memref<8x32xf32, #tpu.memory_space<vmem>>, %arg3: memref<24x32xbf16, #tpu.memory_space<vmem>>, %arg4: memref<32x32xbf16, #tpu.memory_space<vmem>>, %arg5: memref<64x128xbf16, #tpu.memory_space<vmem>>, %arg6: memref<32x32xbf16, #tpu.memory_space<vmem>>, %arg7: memref<32x128xbf16, #tpu.memory_space<vmem>>, %arg8: memref<8x128xf32, #tpu.memory_space<vmem>>, %arg9: memref<8x8xf32, #tpu.memory_space<vmem>>, %arg10: memref<8x32xf32, #tpu.memory_space<vmem>>) attributes {dimension_semantics = [#tpu.dimension_semantics<parallel>], iteration_bounds = array<i64: 1>, scalar_prefetch = 0 : i64, scratch_operands = 0 : i64, tpu.core_type = #tpu.core_type<tc>, window_params = [{transform_indices = @transform_0, window_bounds = array<i64: 8, 24>}, {transform_indices = @transform_1, window_bounds = array<i64: 8, 32>}, {pipeline_mode = #tpu.pipeline_mode<synchronous>, transform_indices = @transform_2, window_bounds = array<i64: 24, 32>}, {pipeline_mode = #tpu.pipeline_mode<synchronous>, transform_indices = @transform_3, window_bounds = array<i64: 32, 32>}, {pipeline_mode = #tpu.pipeline_mode<synchronous>, transform_indices = @transform_4, window_bounds = array<i64: 64, 128>}, {pipeline_mode = #tpu.pipeline_mode<synchronous>, transform_indices = @transform_5, window_bounds = array<i64: 32, 32>}, {pipeline_mode = #tpu.pipeline_mode<synchronous>, transform_indices = @transform_6, window_bounds = array<i64: 32, 128>}, {pipeline_mode = #tpu.pipeline_mode<synchronous>, transform_indices = @transform_7, window_bounds = array<i64: 8, 128>}, {transform_indices = @transform_8, window_bounds = array<i64: 8, 8>}, {transform_indices = @transform_9, window_bounds = array<i64: 8, 32>}]} {
    %c0 = arith.constant 0 : index
    %c0_0 = arith.constant 0 : index
    %0 = vector.load %arg3[%c0, %c0_0] : memref<24x32xbf16, #tpu.memory_space<vmem>>, vector<24x32xbf16>
    %c0_1 = arith.constant 0 : index
    %c0_2 = arith.constant 0 : index
    %1 = vector.load %arg4[%c0_1, %c0_2] : memref<32x32xbf16, #tpu.memory_space<vmem>>, vector<32x32xbf16>
    %c0_3 = arith.constant 0 : index
    %c0_4 = arith.constant 0 : index
    %2 = vector.load %arg5[%c0_3, %c0_4] : memref<64x128xbf16, #tpu.memory_space<vmem>>, vector<64x128xbf16>
    %c0_5 = arith.constant 0 : index
    %c0_6 = arith.constant 0 : index
    %3 = vector.load %arg6[%c0_5, %c0_6] : memref<32x32xbf16, #tpu.memory_space<vmem>>, vector<32x32xbf16>
    %c0_7 = arith.constant 0 : index
    %c0_8 = arith.constant 0 : index
    %4 = vector.load %arg7[%c0_7, %c0_8] : memref<32x128xbf16, #tpu.memory_space<vmem>>, vector<32x128xbf16>
    %c0_9 = arith.constant 0 : index
    %c0_10 = arith.constant 0 : index
    %5 = vector.load %arg8[%c0_9, %c0_10] : memref<8x128xf32, #tpu.memory_space<vmem>>, vector<8x128xf32>
    %6 = vector.extract_strided_slice %5 {offsets = [0, 0], sizes = [1, 32], strides = [1, 1]} : vector<8x128xf32> to vector<1x32xf32>
    %7 = vector.extract_strided_slice %5 {offsets = [1, 0], sizes = [1, 32], strides = [1, 1]} : vector<8x128xf32> to vector<1x32xf32>
    %8 = vector.extract_strided_slice %5 {offsets = [2, 0], sizes = [1, 128], strides = [1, 1]} : vector<8x128xf32> to vector<1x128xf32>
    %9 = vector.extract_strided_slice %5 {offsets = [3, 0], sizes = [1, 32], strides = [1, 1]} : vector<8x128xf32> to vector<1x32xf32>
    %10 = vector.extract_strided_slice %5 {offsets = [4, 0], sizes = [1, 128], strides = [1, 1]} : vector<8x128xf32> to vector<1x128xf32>
    %c0_11 = arith.constant 0 : index
    %c0_12 = arith.constant 0 : index
    %11 = vector.load %arg1[%c0_11, %c0_12] : memref<8x24xf32, #tpu.memory_space<vmem>>, vector<8x24xf32>
    %c0_13 = arith.constant 0 : index
    %c0_14 = arith.constant 0 : index
    %12 = vector.load %arg2[%c0_13, %c0_14] : memref<8x32xf32, #tpu.memory_space<vmem>>, vector<8x32xf32>
    %13 = arith.truncf %11 : vector<8x24xf32> to vector<8x24xbf16>
    %cst = arith.constant dense<0.000000e+00> : vector<8x32xf32>
    %14 = tpu.matmul %13, %0, %cst {dimension_numbers = #tpu.dot_dimension_numbers<[1], [0], [0], [1], [0, 0, 1, 1], [], []>} : vector<8x24xbf16>, vector<24x32xbf16>, vector<8x32xf32> -> vector<8x32xf32>
    %15 = vector.broadcast %6 : vector<1x32xf32> to vector<8x32xf32>
    %16 = arith.addf %14, %15 : vector<8x32xf32>
    %cst_15 = arith.constant 0.000000e+00 : f32
    %17 = vector.broadcast %cst_15 : f32 to vector<8x32xf32>
    %18 = arith.maximumf %16, %17 : vector<8x32xf32>
    %19 = arith.truncf %18 : vector<8x32xf32> to vector<8x32xbf16>
    %cst_16 = arith.constant dense<0.000000e+00> : vector<8x32xf32>
    %20 = tpu.matmul %19, %1, %cst_16 {dimension_numbers = #tpu.dot_dimension_numbers<[1], [0], [0], [1], [0, 0, 1, 1], [], []>} : vector<8x32xbf16>, vector<32x32xbf16>, vector<8x32xf32> -> vector<8x32xf32>
    %21 = vector.broadcast %7 : vector<1x32xf32> to vector<8x32xf32>
    %22 = arith.addf %20, %21 : vector<8x32xf32>
    %cst_17 = arith.constant 0.000000e+00 : f32
    %23 = vector.broadcast %cst_17 : f32 to vector<8x32xf32>
    %24 = arith.maximumf %22, %23 : vector<8x32xf32>
    %25 = tpu.concatenate %24, %12 in 1 : vector<8x32xf32>, vector<8x32xf32> -> vector<8x64xf32>
    %26 = arith.truncf %25 : vector<8x64xf32> to vector<8x64xbf16>
    %cst_18 = arith.constant dense<0.000000e+00> : vector<8x128xf32>
    %27 = tpu.matmul %26, %2, %cst_18 {dimension_numbers = #tpu.dot_dimension_numbers<[1], [0], [0], [1], [0, 0, 1, 1], [], []>} : vector<8x64xbf16>, vector<64x128xbf16>, vector<8x128xf32> -> vector<8x128xf32>
    %28 = vector.broadcast %8 : vector<1x128xf32> to vector<8x128xf32>
    %29 = arith.addf %27, %28 : vector<8x128xf32>
    %30 = vector.extract_strided_slice %29 {offsets = [0, 0], sizes = [8, 32], strides = [1, 1]} : vector<8x128xf32> to vector<8x32xf32>
    %31 = arith.negf %30 : vector<8x32xf32>
    %32 = math.exp %31 : vector<8x32xf32>
    %cst_19 = arith.constant 1.000000e+00 : f32
    %33 = vector.broadcast %cst_19 : f32 to vector<8x32xf32>
    %34 = arith.addf %33, %32 : vector<8x32xf32>
    %35 = arith.divf %33, %34 : vector<8x32xf32>
    %36 = vector.extract_strided_slice %29 {offsets = [0, 32], sizes = [8, 32], strides = [1, 1]} : vector<8x128xf32> to vector<8x32xf32>
    %37 = arith.negf %36 : vector<8x32xf32>
    %38 = math.exp %37 : vector<8x32xf32>
    %cst_20 = arith.constant 1.000000e+00 : f32
    %39 = vector.broadcast %cst_20 : f32 to vector<8x32xf32>
    %40 = arith.addf %39, %38 : vector<8x32xf32>
    %41 = arith.divf %39, %40 : vector<8x32xf32>
    %42 = vector.extract_strided_slice %29 {offsets = [0, 64], sizes = [8, 32], strides = [1, 1]} : vector<8x128xf32> to vector<8x32xf32>
    %43 = vector.extract_strided_slice %29 {offsets = [0, 96], sizes = [8, 32], strides = [1, 1]} : vector<8x128xf32> to vector<8x32xf32>
    %44 = arith.mulf %35, %43 : vector<8x32xf32>
    %45 = arith.addf %42, %44 : vector<8x32xf32>
    %46 = math.tanh %45 : vector<8x32xf32>
    %cst_21 = arith.constant 1.000000e+00 : f32
    %47 = vector.broadcast %cst_21 : f32 to vector<8x32xf32>
    %48 = arith.subf %47, %41 : vector<8x32xf32>
    %49 = arith.mulf %48, %46 : vector<8x32xf32>
    %50 = arith.mulf %41, %12 : vector<8x32xf32>
    %51 = arith.addf %49, %50 : vector<8x32xf32>
    %52 = arith.truncf %51 : vector<8x32xf32> to vector<8x32xbf16>
    %cst_22 = arith.constant dense<0.000000e+00> : vector<8x32xf32>
    %53 = tpu.matmul %52, %3, %cst_22 {dimension_numbers = #tpu.dot_dimension_numbers<[1], [0], [0], [1], [0, 0, 1, 1], [], []>} : vector<8x32xbf16>, vector<32x32xbf16>, vector<8x32xf32> -> vector<8x32xf32>
    %54 = vector.broadcast %9 : vector<1x32xf32> to vector<8x32xf32>
    %55 = arith.addf %53, %54 : vector<8x32xf32>
    %cst_23 = arith.constant 0.000000e+00 : f32
    %56 = vector.broadcast %cst_23 : f32 to vector<8x32xf32>
    %57 = arith.maximumf %55, %56 : vector<8x32xf32>
    %58 = arith.truncf %57 : vector<8x32xf32> to vector<8x32xbf16>
    %cst_24 = arith.constant dense<0.000000e+00> : vector<8x128xf32>
    %59 = tpu.matmul %58, %4, %cst_24 {dimension_numbers = #tpu.dot_dimension_numbers<[1], [0], [0], [1], [0, 0, 1, 1], [], []>} : vector<8x32xbf16>, vector<32x128xbf16>, vector<8x128xf32> -> vector<8x128xf32>
    %60 = vector.broadcast %10 : vector<1x128xf32> to vector<8x128xf32>
    %61 = arith.addf %59, %60 : vector<8x128xf32>
    %62 = vector.extract_strided_slice %61 {offsets = [0, 0], sizes = [8, 8], strides = [1, 1]} : vector<8x128xf32> to vector<8x8xf32>
    %c0_25 = arith.constant 0 : index
    %c0_26 = arith.constant 0 : index
    %63 = vector.load %arg9[%c0_25, %c0_26] : memref<8x8xf32, #tpu.memory_space<vmem>>, vector<8x8xf32>
    tpu.vector_store %arg9[%c0_25, %c0_26], %62 {strides = array<i32>} : memref<8x8xf32, #tpu.memory_space<vmem>>, vector<8x8xf32>,
    %c0_27 = arith.constant 0 : index
    %c0_28 = arith.constant 0 : index
    %64 = vector.load %arg10[%c0_27, %c0_28] : memref<8x32xf32, #tpu.memory_space<vmem>>, vector<8x32xf32>
    tpu.vector_store %arg10[%c0_27, %c0_28], %51 {strides = array<i32>} : memref<8x32xf32, #tpu.memory_space<vmem>>, vector<8x32xf32>,
    return
  }
  func.func @transform_0(%arg0: i32) -> (i32, i32) {
    %c0_i32 = arith.constant 0 : i32
    %c0_i32_0 = arith.constant 0 : i32
    return %arg0, %c0_i32 : i32, i32
  }
  func.func @transform_1(%arg0: i32) -> (i32, i32) {
    %c0_i32 = arith.constant 0 : i32
    %c0_i32_0 = arith.constant 0 : i32
    return %arg0, %c0_i32 : i32, i32
  }
  func.func @transform_2(%arg0: i32) -> (i32, i32) {
    %c0_i32 = arith.constant 0 : i32
    %c0_i32_0 = arith.constant 0 : i32
    %c0_i32_1 = arith.constant 0 : i32
    return %c0_i32, %c0_i32_0 : i32, i32
  }
  func.func @transform_3(%arg0: i32) -> (i32, i32) {
    %c0_i32 = arith.constant 0 : i32
    %c0_i32_0 = arith.constant 0 : i32
    %c0_i32_1 = arith.constant 0 : i32
    return %c0_i32, %c0_i32_0 : i32, i32
  }
  func.func @transform_4(%arg0: i32) -> (i32, i32) {
    %c0_i32 = arith.constant 0 : i32
    %c0_i32_0 = arith.constant 0 : i32
    %c0_i32_1 = arith.constant 0 : i32
    return %c0_i32, %c0_i32_0 : i32, i32
  }
  func.func @transform_5(%arg0: i32) -> (i32, i32) {
    %c0_i32 = arith.constant 0 : i32
    %c0_i32_0 = arith.constant 0 : i32
    %c0_i32_1 = arith.constant 0 : i32
    return %c0_i32, %c0_i32_0 : i32, i32
  }
  func.func @transform_6(%arg0: i32) -> (i32, i32) {
    %c0_i32 = arith.constant 0 : i32
    %c0_i32_0 = arith.constant 0 : i32
    %c0_i32_1 = arith.constant 0 : i32
    return %c0_i32, %c0_i32_0 : i32, i32
  }
  func.func @transform_7(%arg0: i32) -> (i32, i32) {
    %c0_i32 = arith.constant 0 : i32
    %c0_i32_0 = arith.constant 0 : i32
    %c0_i32_1 = arith.constant 0 : i32
    return %c0_i32, %c0_i32_0 : i32, i32
  }
  func.func @transform_8(%arg0: i32) -> (i32, i32) {
    %c0_i32 = arith.constant 0 : i32
    %c0_i32_0 = arith.constant 0 : i32
    return %arg0, %c0_i32 : i32, i32
  }
  func.func @transform_9(%arg0: i32) -> (i32, i32) {
    %c0_i32 = arith.constant 0 : i32
    %c0_i32_0 = arith.constant 0 : i32
    return %arg0, %c0_i32 : i32, i32
  }
}

</mosaic_0001>

<llo_original>
// kernel: tpu_custom_call.1
$region0: #{tpu_custom_call.1}
  #allocation0 [shape = 'u32[]', space=smem, size = 0x4, offset = 0x4, fixed_abs, tag = 'smem constant byte address 0x4 - core index']
  #allocation1 [shape = 'u32[144,128]{1,0:T(1,128)}', space=vmem, size = 0x12000, scoped, tag = 'internal scratch']
  %s0 = inlined_call_operand.hbm [shape: f32[8,24], index: 0, kind: input, shape index: {}]
  %s1 = inlined_call_operand.hbm [shape: f32[8,32], index: 1, kind: input, shape index: {}]
  %s2 = inlined_call_operand.hbm [shape: bf16[24,32], index: 2, kind: input, shape index: {}]
  %s3 = inlined_call_operand.hbm [shape: bf16[32,32], index: 3, kind: input, shape index: {}]
  %s4 = inlined_call_operand.hbm [shape: bf16[64,128], index: 4, kind: input, shape index: {}]
  %s5 = inlined_call_operand.vmem [shape: bf16[32,32], index: 5, kind: input, shape index: {}]
  %s6 = inlined_call_operand.hbm [shape: bf16[32,128], index: 6, kind: input, shape index: {}]
  %s7 = inlined_call_operand.vmem [shape: f32[8,128], index: 7, kind: input, shape index: {}]
  %s8 = inlined_call_operand.hbm [shape: f32[8,8], index: 8, kind: output, shape index: {0}]
  %s9 = inlined_call_operand.hbm [shape: f32[8,32], index: 9, kind: output, shape index: {1}]
  %10 = xla_tuple %s8, %s9
  %s11 = sld [smem:[#allocation0]]
  $region74: #{tpu_custom_call.1} parent=0
    _
  %s13 = ssub.s32 1, %s11
  %s14 = scalar_select 0, %s13, %s11
  $region1: #{tpu_custom_call.1} parent=0
    #allocation2 [shape = 'u8[4096]{0}', space=vmem, size = 0x1000, scoped, tag = 'input window, operand 0, single buffered']
    #allocation3 [shape = 's32[1]{0}', space=sflag, size = 0x4, scoped, tag = 'scoped memory for tpu_custom_call.1']
    #allocation4 [shape = 's32[1]{0}', space=sflag, size = 0x4, scoped, tag = 'scoped memory for tpu_custom_call.1']
    #allocation5 [shape = 'u8[4096]{0}', space=vmem, size = 0x1000, scoped, tag = 'input window, operand 1, single buffered']
    #allocation6 [shape = 's32[1]{0}', space=sflag, size = 0x4, scoped, tag = 'scoped memory for tpu_custom_call.1']
    #allocation7 [shape = 'u8[6144]{0}', space=vmem, size = 0x1800, scoped, tag = 'input window, operand 2, single buffered']
    #allocation8 [shape = 'u8[8192]{0}', space=vmem, size = 0x2000, scoped, tag = 'input window, operand 3, single buffered']
    #allocation9 [shape = 's32[1]{0}', space=sflag, size = 0x4, scoped, tag = 'scoped memory for tpu_custom_call.1']
    #allocation10 [shape = 'u8[16384]{0}', space=vmem, size = 0x4000, scoped, tag = 'input window, operand 4, single buffered']
    #allocation11 [shape = 'u8[8192]{0}', space=vmem, size = 0x2000, scoped, tag = 'input window, operand 6, single buffered']
    #allocation12 [shape = 's32[1]{0}', space=sflag, size = 0x4, scoped, tag = 'scoped memory for tpu_custom_call.1']
    #allocation13 [shape = 'u8[4096]{0}', space=vmem, size = 0x1000, scoped, tag = 'output window, operand 0, single buffered']
    #allocation14 [shape = 'u8[4096]{0}', space=vmem, size = 0x1000, scoped, tag = 'output window, operand 1, single buffered']
    #allocation15 [shape = 's32[1]{0}', space=sflag, size = 0x4, scoped, tag = 'scoped memory for tpu_custom_call.1']
    %15 = vsyncpa [#allocation3], 0
    %16 = vsyncpa [#allocation6], 0
    %17 = vsyncpa [#allocation9], 0
    %18 = vsyncpa [#allocation12], 0
    %19 = vsyncpa [#allocation4], 0
    %20 = vsyncpa [#allocation15], 0
    // Predicated region
    $region2: #{tpu_custom_call.1} parent=1 // pred_check
      _
    $region3: #{tpu_custom_call.1} parent=1 // pred_check_branch
      %22 = sbr.rel (0) target = $region5
    $region4: #{tpu_custom_call.1} parent=1 // pred_region
      %s24 = ssub.s32 128, 128
      %25 = vsyncadd [#allocation3], %s24
      %s27 = sshll.u32 [#allocation2], 4
      %s28 = int_to_ptr.vmem [resolvable:$true] %s27
      %30 = dma.hbm_to_vmem [thread:$0]  %s0, 128, %s28, [#allocation3]
    $region5: #{tpu_custom_call.1} parent=1 // pred_fallthru
      _
    // Predicated region
    $region6: #{tpu_custom_call.1} parent=1 // pred_check
      _
    $region7: #{tpu_custom_call.1} parent=1 // pred_check_branch
      %32 = sbr.rel (0) target = $region9
    $region8: #{tpu_custom_call.1} parent=1 // pred_region
      %s34 = ssub.s32 128, 128
      %35 = vsyncadd [#allocation6], %s34
      %s37 = sshll.u32 [#allocation5], 4
      %s38 = int_to_ptr.vmem [resolvable:$true] %s37
      %40 = dma.hbm_to_vmem [thread:$0]  %s1, 128, %s38, [#allocation6]
    $region9: #{tpu_custom_call.1} parent=1 // pred_fallthru
      _
    // Predicated region
    $region10: #{tpu_custom_call.1} parent=1 // pred_check
      _
    $region11: #{tpu_custom_call.1} parent=1 // pred_check_branch
      %42 = sbr.rel (0) target = $region13
    $region12: #{tpu_custom_call.1} parent=1 // pred_region
      %s44 = ssub.s32 192, 192
      %45 = vsyncadd [#allocation6], %s44
      %s46 = sshll.u32 [#allocation7], 4
      %s47 = int_to_ptr.vmem [resolvable:$true] %s46
      %52 = dma.hbm_to_vmem [thread:$0]  %s2, 192, %s47, [#allocation6], 64, 64, 4
    $region13: #{tpu_custom_call.1} parent=1 // pred_fallthru
      _
    // Predicated region
    $region14: #{tpu_custom_call.1} parent=1 // pred_check
      _
    $region15: #{tpu_custom_call.1} parent=1 // pred_check_branch
      %54 = sbr.rel (0) target = $region17
    $region16: #{tpu_custom_call.1} parent=1 // pred_region
      %s56 = ssub.s32 256, 256
      %57 = vsyncadd [#allocation9], %s56
      %s58 = sshll.u32 [#allocation8], 4
      %s59 = int_to_ptr.vmem [resolvable:$true] %s58
      %64 = dma.hbm_to_vmem [thread:$0]  %s3, 256, %s59, [#allocation9], 64, 64, 4
    $region17: #{tpu_custom_call.1} parent=1 // pred_fallthru
      _
    // Predicated region
    $region18: #{tpu_custom_call.1} parent=1 // pred_check
      _
    $region19: #{tpu_custom_call.1} parent=1 // pred_check_branch
      %66 = sbr.rel (0) target = $region21
    $region20: #{tpu_custom_call.1} parent=1 // pred_region
      %s68 = ssub.s32 512, 512
      %69 = vsyncadd [#allocation9], %s68
      %s70 = sshll.u32 [#allocation10], 4
      %s71 = int_to_ptr.vmem [resolvable:$true] %s70
      %76 = dma.hbm_to_vmem [thread:$0]  %s4, 512, %s71, [#allocation9], 64, 64, 4
    $region21: #{tpu_custom_call.1} parent=1 // pred_fallthru
      _
    // Predicated region
    $region22: #{tpu_custom_call.1} parent=1 // pred_check
      _
    $region23: #{tpu_custom_call.1} parent=1 // pred_check_branch
      %78 = sbr.rel (0) target = $region25
    $region24: #{tpu_custom_call.1} parent=1 // pred_region
      _
    $region25: #{tpu_custom_call.1} parent=1 // pred_fallthru
      _
    // Predicated region
    $region26: #{tpu_custom_call.1} parent=1 // pred_check
      _
    $region27: #{tpu_custom_call.1} parent=1 // pred_check_branch
      %80 = sbr.rel (0) target = $region29
    $region28: #{tpu_custom_call.1} parent=1 // pred_region
      %s82 = ssub.s32 256, 256
      %83 = vsyncadd [#allocation12], %s82
      %s84 = sshll.u32 [#allocation11], 4
      %s85 = int_to_ptr.vmem [resolvable:$true] %s84
      %90 = dma.hbm_to_vmem [thread:$0]  %s6, 256, %s85, [#allocation12], 64, 64, 4
    $region29: #{tpu_custom_call.1} parent=1 // pred_fallthru
      _
    // Predicated region
    $region30: #{tpu_custom_call.1} parent=1 // pred_check
      _
    $region31: #{tpu_custom_call.1} parent=1 // pred_check_branch
      %92 = sbr.rel (0) target = $region33
    $region32: #{tpu_custom_call.1} parent=1 // pred_region
      _
    $region33: #{tpu_custom_call.1} parent=1 // pred_fallthru
      _
    // Predicated region
    $region34: #{tpu_custom_call.1} parent=1 // pred_check
      _
    $region35: #{tpu_custom_call.1} parent=1 // pred_check_branch
      %94 = sbr.rel (0) target = $region37
    $region36: #{tpu_custom_call.1} parent=1 // pred_region
      %95 = dma.done [#allocation3], 128
    $region37: #{tpu_custom_call.1} parent=1 // pred_fallthru
      _
    // Predicated region
    $region38: #{tpu_custom_call.1} parent=1 // pred_check
      _
    $region39: #{tpu_custom_call.1} parent=1 // pred_check_branch
      %97 = sbr.rel (0) target = $region41
    $region40: #{tpu_custom_call.1} parent=1 // pred_region
      %98 = dma.done [#allocation6], 128
    $region41: #{tpu_custom_call.1} parent=1 // pred_fallthru
      _
    // Predicated region
    $region42: #{tpu_custom_call.1} parent=1 // pred_check
      _
    $region43: #{tpu_custom_call.1} parent=1 // pred_check_branch
      %100 = sbr.rel (0) target = $region45
    $region44: #{tpu_custom_call.1} parent=1 // pred_region
      %101 = dma.done [#allocation6], 192
    $region45: #{tpu_custom_call.1} parent=1 // pred_fallthru
      _
    // Predicated region
    $region46: #{tpu_custom_call.1} parent=1 // pred_check
      _
    $region47: #{tpu_custom_call.1} parent=1 // pred_check_branch
      %103 = sbr.rel (0) target = $region49
    $region48: #{tpu_custom_call.1} parent=1 // pred_region
      %104 = dma.done [#allocation9], 256
    $region49: #{tpu_custom_call.1} parent=1 // pred_fallthru
      _
    // Predicated region
    $region50: #{tpu_custom_call.1} parent=1 // pred_check
      _
    $region51: #{tpu_custom_call.1} parent=1 // pred_check_branch
      %106 = sbr.rel (0) target = $region53
    $region52: #{tpu_custom_call.1} parent=1 // pred_region
      %107 = dma.done [#allocation9], 512
    $region53: #{tpu_custom_call.1} parent=1 // pred_fallthru
      _
    // Predicated region
    $region54: #{tpu_custom_call.1} parent=1 // pred_check
      _
    $region55: #{tpu_custom_call.1} parent=1 // pred_check_branch
      %109 = sbr.rel (0) target = $region57
    $region56: #{tpu_custom_call.1} parent=1 // pred_region
      %110 = dma.done [#allocation12], 256
    $region57: #{tpu_custom_call.1} parent=1 // pred_fallthru
      _
    %v112 = vld [vmem:[#allocation7] sm:$0xf]
    %v113 = vld [vmem:[#allocation7 + $0x4] sm:$0xf]
    %v114 = vld [vmem:[#allocation7 + $0x8] sm:$0xf]
    %v115 = vld [vmem:[#allocation8] sm:$0xf]
    %v116 = vld [vmem:[#allocation8 + $0x4] sm:$0xf]
    %v117 = vld [vmem:[#allocation8 + $0x8] sm:$0xf]
    %v118 = vld [vmem:[#allocation8 + $0xc] sm:$0xf]
    %v119 = vld [vmem:[#allocation10] sm:$0xf]
    %v120 = vld [vmem:[#allocation10 + $0x4] sm:$0xf]
    %v121 = vld [vmem:[#allocation10 + $0x8] sm:$0xf]
    %v122 = vld [vmem:[#allocation10 + $0xc] sm:$0xf]
    %v123 = vld [vmem:[#allocation10 + $0x10] sm:$0xf]
    %v124 = vld [vmem:[#allocation10 + $0x14] sm:$0xf]
    %v125 = vld [vmem:[#allocation10 + $0x18] sm:$0xf]
    %v126 = vld [vmem:[#allocation10 + $0x1c] sm:$0xf]
    %v127 = vld [vmem:[%s5] sm:$0xf]
    %v128 = vld [vmem:[%s5 + $0x4] sm:$0xf]
    %v129 = vld [vmem:[%s5 + $0x8] sm:$0xf]
    %v130 = vld [vmem:[%s5 + $0xc] sm:$0xf]
    %v131 = vld [vmem:[#allocation11] sm:$0xf]
    %v132 = vld [vmem:[#allocation11 + $0x4] sm:$0xf]
    %v133 = vld [vmem:[#allocation11 + $0x8] sm:$0xf]
    %v134 = vld [vmem:[#allocation11 + $0xc] sm:$0xf]
    %v135 = vld [vmem:[%s7] sm:$0xff]
    %v136 = vld [vmem:[#allocation2] sm:$0xff]
    %v137 = vld [vmem:[#allocation5] sm:$0xff]
    %v138 = vpack.c.bf16 %v136, %v136
    %v139 = vlaneseq
    %v140 = vshrl.u32 %v139, 7
    %v141 = vsub.s32 0, %v140
    %v142 = vrot.slane %v135, %v141
    %v146 = vunpack.c.l.b16 %v112
    %v147 = vunpack.c.l.b16 %v113
    %v148 = vunpack.c.l.b16 %v114
    %v149 = vpack.c.b16 %v147, %v146
    %v150 = vpack.c.b16 %v148, %v148
    %vm152 = vcmask 195584
    %v154 = vsel %vm152, %v138, 0
    %vm156 = vcmask 1043456
    %v158 = vsel %vm156, %v150, 0
    %160 = vmatprep.subr.bf16.mxu0 0
    %161 = vmatpush1.bf16.msra.mxu0 %v149
    %162 = vmatprep.subr.bf16.mxu0 0
    %163 = vmatpush1.bf16.msra.mxu0 %v158
    %164 = vmatprep.subr.bf16.mxu0 0
    %165 = vmatpush1.bf16.msra.mxu0 0
    %166 = vmatprep.subr.bf16.mxu0 0
    %167 = vmatpush1.bf16.msra.mxu0 0
    %168 = vmatprep.subr.bf16.mxu0 0
    %169 = vmatpush1.bf16.msra.mxu0 0
    %170 = vmatprep.subr.bf16.mxu0 0
    %171 = vmatpush1.bf16.msra.mxu0 0
    %172 = vmatprep.subr.bf16.mxu0 0
    %173 = vmatpush1.bf16.msra.mxu0 0
    %174 = vmatprep.subr.bf16.mxu0 0
    %175 = vmatpush1.bf16.msra.mxu0 0
    %176 = vmatprep.subr.bf16.mxu0 0
    %177 = vmatpush1.bf16.msra.mxu0 0
    %178 = vmatprep.subr.bf16.mxu0 0
    %179 = vmatpush1.bf16.msra.mxu0 0
    %180 = vmatprep.subr.bf16.mxu0 0
    %181 = vmatpush1.bf16.msra.mxu0 0
    %182 = vmatprep.subr.bf16.mxu0 0
    %183 = vmatpush1.bf16.msra.mxu0 0
    %184 = vmatprep.subr.bf16.mxu0 0
    %185 = vmatpush1.bf16.msra.mxu0 0
    %186 = vmatprep.subr.bf16.mxu0 0
    %187 = vmatpush1.bf16.msra.mxu0 0
    %188 = vmatprep.subr.bf16.mxu0 0
    %189 = vmatpush1.bf16.msra.mxu0 0
    %190 = vmatprep.subr.bf16.mxu0 0
    %191 = vmatpush1.bf16.msra.mxu0 0
    %192 = vmatprep.mubr.bf16.mxu0 0
    %193 = vmatmul.mubr.bf16.gmra.mrb[0].mxu0 %v154
    %v194 = vpop.f32.mrb[0].mxu0
    %v195 = vadd.f32 %v142, %v194
    %v196 = vpop.f32.mrb[0].mxu0
    %v197 = vpop.f32.mrb[0].mxu0
    %v198 = vpop.f32.mrb[0].mxu0
    %199 = vdwg.mxu0
    %v200 = vmax.f32 %v195, 0.0
    %v201 = vpack.c.bf16 %v200, %v200
    %v202 = vlaneseq
    %v203 = vshrl.u32 %v202, 7
    %v204 = vsub.s32 1, %v203
    %v205 = vrot.slane %v135, %v204
    %v210 = vunpack.c.l.b16 %v115
    %v211 = vunpack.c.l.b16 %v116
    %v212 = vunpack.c.l.b16 %v117
    %v213 = vunpack.c.l.b16 %v118
    %v214 = vpack.c.b16 %v211, %v210
    %v215 = vpack.c.b16 %v213, %v212
    %vm218 = vcmask 261120
    %v220 = vsel %vm218, %v201, 0
    %222 = vmatprep.subr.bf16.mxu0 0
    %223 = vmatpush1.bf16.msra.mxu0 %v214
    %224 = vmatprep.subr.bf16.mxu0 0
    %225 = vmatpush1.bf16.msra.mxu0 %v215
    %226 = vmatprep.subr.bf16.mxu0 0
    %227 = vmatpush1.bf16.msra.mxu0 0
    %228 = vmatprep.subr.bf16.mxu0 0
    %229 = vmatpush1.bf16.msra.mxu0 0
    %230 = vmatprep.subr.bf16.mxu0 0
    %231 = vmatpush1.bf16.msra.mxu0 0
    %232 = vmatprep.subr.bf16.mxu0 0
    %233 = vmatpush1.bf16.msra.mxu0 0
    %234 = vmatprep.subr.bf16.mxu0 0
    %235 = vmatpush1.bf16.msra.mxu0 0
    %236 = vmatprep.subr.bf16.mxu0 0
    %237 = vmatpush1.bf16.msra.mxu0 0
    %238 = vmatprep.subr.bf16.mxu0 0
    %239 = vmatpush1.bf16.msra.mxu0 0
    %240 = vmatprep.subr.bf16.mxu0 0
    %241 = vmatpush1.bf16.msra.mxu0 0
    %242 = vmatprep.subr.bf16.mxu0 0
    %243 = vmatpush1.bf16.msra.mxu0 0
    %244 = vmatprep.subr.bf16.mxu0 0
    %245 = vmatpush1.bf16.msra.mxu0 0
    %246 = vmatprep.subr.bf16.mxu0 0
    %247 = vmatpush1.bf16.msra.mxu0 0
    %248 = vmatprep.subr.bf16.mxu0 0
    %249 = vmatpush1.bf16.msra.mxu0 0
    %250 = vmatprep.subr.bf16.mxu0 0
    %251 = vmatpush1.bf16.msra.mxu0 0
    %252 = vmatprep.subr.bf16.mxu0 0
    %253 = vmatpush1.bf16.msra.mxu0 0
    %254 = vmatprep.mubr.bf16.mxu0 0
    %255 = vmatmul.mubr.bf16.gmra.mrb[0].mxu0 %v220
    %v256 = vpop.f32.mrb[0].mxu0
    %v257 = vadd.f32 %v205, %v256
    %v258 = vpop.f32.mrb[0].mxu0
    %v259 = vpop.f32.mrb[0].mxu0
    %v260 = vpop.f32.mrb[0].mxu0
    %261 = vdwg.mxu0
    %v262 = vmax.f32 %v257, 0.0
    %264 = vrot.lane.b32.xlu0 %v137, 32
    %v265 = vpop.permute.xlu0 %264
    %v267 = vsel %vm218, %v262, %v265
    %v268 = vpack.c.bf16 %v267, %v267
    %v269 = vlaneseq
    %v270 = vshrl.u32 %v269, 7
    %v271 = vsub.s32 2, %v270
    %v272 = vrot.slane %v135, %v271
    %v281 = vunpack.c.l.b16 %v119
    %v282 = vunpack.c.l.b16 %v120
    %v283 = vunpack.c.l.b16 %v121
    %v284 = vunpack.c.l.b16 %v122
    %v285 = vunpack.c.l.b16 %v123
    %v286 = vunpack.c.l.b16 %v124
    %v287 = vunpack.c.l.b16 %v125
    %v288 = vunpack.c.l.b16 %v126
    %v289 = vpack.c.b16 %v282, %v281
    %v290 = vpack.c.b16 %v284, %v283
    %v291 = vpack.c.b16 %v286, %v285
    %v292 = vpack.c.b16 %v288, %v287
    %vm297 = vcmask 523264
    %v299 = vsel %vm297, %v268, 0
    %301 = vmatprep.subr.bf16.mxu0 0
    %302 = vmatpush1.bf16.msra.mxu0 %v289
    %303 = vmatprep.subr.bf16.mxu0 0
    %304 = vmatpush1.bf16.msra.mxu0 %v290
    %305 = vmatprep.subr.bf16.mxu0 0
    %306 = vmatpush1.bf16.msra.mxu0 %v291
    %307 = vmatprep.subr.bf16.mxu0 0
    %308 = vmatpush1.bf16.msra.mxu0 %v292
    %309 = vmatprep.subr.bf16.mxu0 0
    %310 = vmatpush1.bf16.msra.mxu0 0
    %311 = vmatprep.subr.bf16.mxu0 0
    %312 = vmatpush1.bf16.msra.mxu0 0
    %313 = vmatprep.subr.bf16.mxu0 0
    %314 = vmatpush1.bf16.msra.mxu0 0
    %315 = vmatprep.subr.bf16.mxu0 0
    %316 = vmatpush1.bf16.msra.mxu0 0
    %317 = vmatprep.subr.bf16.mxu0 0
    %318 = vmatpush1.bf16.msra.mxu0 0
    %319 = vmatprep.subr.bf16.mxu0 0
    %320 = vmatpush1.bf16.msra.mxu0 0
    %321 = vmatprep.subr.bf16.mxu0 0
    %322 = vmatpush1.bf16.msra.mxu0 0
    %323 = vmatprep.subr.bf16.mxu0 0
    %324 = vmatpush1.bf16.msra.mxu0 0
    %325 = vmatprep.subr.bf16.mxu0 0
    %326 = vmatpush1.bf16.msra.mxu0 0
    %327 = vmatprep.subr.bf16.mxu0 0
    %328 = vmatpush1.bf16.msra.mxu0 0
    %329 = vmatprep.subr.bf16.mxu0 0
    %330 = vmatpush1.bf16.msra.mxu0 0
    %331 = vmatprep.subr.bf16.mxu0 0
    %332 = vmatpush1.bf16.msra.mxu0 0
    %333 = vmatprep.mubr.bf16.mxu0 0
    %334 = vmatmul.mubr.bf16.gmra.mrb[0].mxu0 %v299
    %v335 = vpop.f32.mrb[0].mxu0
    %v336 = vadd.f32 %v272, %v335
    %v337 = vpop.f32.mrb[0].mxu0
    %v338 = vpop.f32.mrb[0].mxu0
    %v339 = vpop.f32.mrb[0].mxu0
    %340 = vdwg.mxu0
    %v341 = vxor.u32 %v336, 2147483648
    %v342 = vmul.f32 %v341, 1.442695
    %v343 = vpow.pop %v342
    %v344 = vadd.f32 %v343, 1.0
    %v345 = vrcp.pop %v344
    %v346 = vmul.f32 1.0, %v345
    %348 = vrot.lane.b32.xlu0 %v336, 32
    %v349 = vpop.permute.xlu0 %348
    %v351 = vmul.f32 %v346, %v349
    %353 = vrot.lane.b32.xlu0 %v351, 64
    %v354 = vpop.permute.xlu0 %353
    %v356 = vadd.f32 %v336, %v354
    %v357 = vtanh.pop %v356
    %v358 = vsub.f32 1.0, %v346
    %360 = vrot.lane.b32.xlu0 %v357, 96
    %v361 = vpop.permute.xlu0 %360
    %v363 = vmul.f32 %v358, %v361
    %v364 = vmul.f32 %v346, %v265
    %v365 = vadd.f32 %v363, %v364
    %v366 = vpack.c.bf16 %v365, %v365
    %v367 = vlaneseq
    %v368 = vshrl.u32 %v367, 7
    %v369 = vsub.s32 3, %v368
    %v370 = vrot.slane %v135, %v369
    %372 = vrot.lane.b32.xlu0 %v366, 96
    %v373 = vpop.permute.xlu0 %372
    %v378 = vunpack.c.l.b16 %v127
    %v379 = vunpack.c.l.b16 %v128
    %v380 = vunpack.c.l.b16 %v129
    %v381 = vunpack.c.l.b16 %v130
    %v382 = vpack.c.b16 %v379, %v378
    %v383 = vpack.c.b16 %v381, %v380
    %v387 = vsel %vm218, %v373, 0
    %389 = vmatprep.subr.bf16.mxu0 0
    %390 = vmatpush1.bf16.msra.mxu0 %v382
    %391 = vmatprep.subr.bf16.mxu0 0
    %392 = vmatpush1.bf16.msra.mxu0 %v383
    %393 = vmatprep.subr.bf16.mxu0 0
    %394 = vmatpush1.bf16.msra.mxu0 0
    %395 = vmatprep.subr.bf16.mxu0 0
    %396 = vmatpush1.bf16.msra.mxu0 0
    %397 = vmatprep.subr.bf16.mxu0 0
    %398 = vmatpush1.bf16.msra.mxu0 0
    %399 = vmatprep.subr.bf16.mxu0 0
    %400 = vmatpush1.bf16.msra.mxu0 0
    %401 = vmatprep.subr.bf16.mxu0 0
    %402 = vmatpush1.bf16.msra.mxu0 0
    %403 = vmatprep.subr.bf16.mxu0 0
    %404 = vmatpush1.bf16.msra.mxu0 0
    %405 = vmatprep.subr.bf16.mxu0 0
    %406 = vmatpush1.bf16.msra.mxu0 0
    %407 = vmatprep.subr.bf16.mxu0 0
    %408 = vmatpush1.bf16.msra.mxu0 0
    %409 = vmatprep.subr.bf16.mxu0 0
    %410 = vmatpush1.bf16.msra.mxu0 0
    %411 = vmatprep.subr.bf16.mxu0 0
    %412 = vmatpush1.bf16.msra.mxu0 0
    %413 = vmatprep.subr.bf16.mxu0 0
    %414 = vmatpush1.bf16.msra.mxu0 0
    %415 = vmatprep.subr.bf16.mxu0 0
    %416 = vmatpush1.bf16.msra.mxu0 0
    %417 = vmatprep.subr.bf16.mxu0 0
    %418 = vmatpush1.bf16.msra.mxu0 0
    %419 = vmatprep.subr.bf16.mxu0 0
    %420 = vmatpush1.bf16.msra.mxu0 0
    %421 = vmatprep.mubr.bf16.mxu0 0
    %422 = vmatmul.mubr.bf16.gmra.mrb[0].mxu0 %v387
    %v423 = vpop.f32.mrb[0].mxu0
    %v424 = vadd.f32 %v370, %v423
    %v425 = vpop.f32.mrb[0].mxu0
    %v426 = vpop.f32.mrb[0].mxu0
    %v427 = vpop.f32.mrb[0].mxu0
    %428 = vdwg.mxu0
    %v429 = vmax.f32 %v424, 0.0
    %v430 = vpack.c.bf16 %v429, %v429
    %v431 = vlaneseq
    %v432 = vshrl.u32 %v431, 7
    %v433 = vsub.s32 4, %v432
    %v434 = vrot.slane %v135, %v433
    %v439 = vunpack.c.l.b16 %v131
    %v440 = vunpack.c.l.b16 %v132
    %v441 = vunpack.c.l.b16 %v133
    %v442 = vunpack.c.l.b16 %v134
    %v443 = vpack.c.b16 %v440, %v439
    %v444 = vpack.c.b16 %v442, %v441
    %v448 = vsel %vm218, %v430, 0
    %450 = vmatprep.subr.bf16.mxu0 0
    %451 = vmatpush1.bf16.msra.mxu0 %v443
    %452 = vmatprep.subr.bf16.mxu0 0
    %453 = vmatpush1.bf16.msra.mxu0 %v444
    %454 = vmatprep.subr.bf16.mxu0 0
    %455 = vmatpush1.bf16.msra.mxu0 0
    %456 = vmatprep.subr.bf16.mxu0 0
    %457 = vmatpush1.bf16.msra.mxu0 0
    %458 = vmatprep.subr.bf16.mxu0 0
    %459 = vmatpush1.bf16.msra.mxu0 0
    %460 = vmatprep.subr.bf16.mxu0 0
    %461 = vmatpush1.bf16.msra.mxu0 0
    %462 = vmatprep.subr.bf16.mxu0 0
    %463 = vmatpush1.bf16.msra.mxu0 0
    %464 = vmatprep.subr.bf16.mxu0 0
    %465 = vmatpush1.bf16.msra.mxu0 0
    %466 = vmatprep.subr.bf16.mxu0 0
    %467 = vmatpush1.bf16.msra.mxu0 0
    %468 = vmatprep.subr.bf16.mxu0 0
    %469 = vmatpush1.bf16.msra.mxu0 0
    %470 = vmatprep.subr.bf16.mxu0 0
    %471 = vmatpush1.bf16.msra.mxu0 0
    %472 = vmatprep.subr.bf16.mxu0 0
    %473 = vmatpush1.bf16.msra.mxu0 0
    %474 = vmatprep.subr.bf16.mxu0 0
    %475 = vmatpush1.bf16.msra.mxu0 0
    %476 = vmatprep.subr.bf16.mxu0 0
    %477 = vmatpush1.bf16.msra.mxu0 0
    %478 = vmatprep.subr.bf16.mxu0 0
    %479 = vmatpush1.bf16.msra.mxu0 0
    %480 = vmatprep.subr.bf16.mxu0 0
    %481 = vmatpush1.bf16.msra.mxu0 0
    %482 = vmatprep.mubr.bf16.mxu0 0
    %483 = vmatmul.mubr.bf16.gmra.mrb[0].mxu0 %v448
    %v484 = vpop.f32.mrb[0].mxu0
    %v485 = vadd.f32 %v434, %v484
    %v486 = vpop.f32.mrb[0].mxu0
    %v487 = vpop.f32.mrb[0].mxu0
    %v488 = vpop.f32.mrb[0].mxu0
    %489 = vdwg.mxu0
    %vm490 = vcmask 64512
    %491 = vst.msk [vmem:[#allocation13] sm:$0xff] %vm490, %v485
    %493 = vrot.lane.b32.xlu0 %v365, 96
    %v494 = vpop.permute.xlu0 %493
    %496 = vst.msk [vmem:[#allocation14] sm:$0xff] %vm218, %v494
    // Predicated region
    $region58: #{tpu_custom_call.1} parent=1 // pred_check
      _
    $region59: #{tpu_custom_call.1} parent=1 // pred_check_branch
      %498 = sbr.rel (0) target = $region61
    $region60: #{tpu_custom_call.1} parent=1 // pred_region
      %s500 = ssub.s32 128, 128
      %501 = vsyncadd [#allocation4], %s500
      %s503 = sshll.u32 [#allocation13], 4
      %s504 = int_to_ptr.vmem [resolvable:$true] %s503
      %506 = dma.vmem_to_hbm [thread:$0]  %s504, 128, %s8, [#allocation4]
    $region61: #{tpu_custom_call.1} parent=1 // pred_fallthru
      _
    // Predicated region
    $region62: #{tpu_custom_call.1} parent=1 // pred_check
      _
    $region63: #{tpu_custom_call.1} parent=1 // pred_check_branch
      %508 = sbr.rel (0) target = $region65
    $region64: #{tpu_custom_call.1} parent=1 // pred_region
      %s510 = ssub.s32 128, 128
      %511 = vsyncadd [#allocation15], %s510
      %s513 = sshll.u32 [#allocation14], 4
      %s514 = int_to_ptr.vmem [resolvable:$true] %s513
      %516 = dma.vmem_to_hbm [thread:$0]  %s514, 128, %s9, [#allocation15]
    $region65: #{tpu_custom_call.1} parent=1 // pred_fallthru
      _
    // Predicated region
    $region66: #{tpu_custom_call.1} parent=1 // pred_check
      _
    $region67: #{tpu_custom_call.1} parent=1 // pred_check_branch
      %518 = sbr.rel (0) target = $region69
    $region68: #{tpu_custom_call.1} parent=1 // pred_region
      %519 = dma.done [#allocation4], 128
    $region69: #{tpu_custom_call.1} parent=1 // pred_fallthru
      _
    // Predicated region
    $region70: #{tpu_custom_call.1} parent=1 // pred_check
      _
    $region71: #{tpu_custom_call.1} parent=1 // pred_check_branch
      %521 = sbr.rel (0) target = $region73
    $region72: #{tpu_custom_call.1} parent=1 // pred_region
      %522 = dma.done [#allocation15], 128
    $region73: #{tpu_custom_call.1} parent=1 // pred_fallthru
      _
    %523 = vsyncpa [#allocation3], 1
    %524 = vsyncpa [#allocation6], 1
    %525 = vsyncpa [#allocation9], 1
    %526 = vsyncpa [#allocation12], 1
    %527 = vsyncpa [#allocation4], 1
    %528 = vsyncpa [#allocation15], 1

</llo_original>
